<compile_context>
chip_gen: v7x
topology: tpu7x:2x2x1
jax: 0.10.0
libtpu: 0.0.40
codegen_flags: <defaults>
</compile_context>

<pallas_src>
import jax
import jax.numpy as jnp
from jax.experimental import pallas as pl
from jax.experimental.pallas import tpu as pltpu


def _round_up(x, m):
    return ((x + m - 1) // m) * m


def _patch_proj_kernel(x_ref, w_ref, b_ref, o_ref):
    # x_ref: (TM, K)  w_ref: (K, E)  b_ref: (1, E) f32  o_ref: (TM, E)
    acc = jnp.dot(x_ref[...], w_ref[...], preferred_element_type=jnp.float32)
    o_ref[...] = (acc + b_ref[...]).astype(o_ref.dtype)


def patch_embed(x, weight, bias, patch_size, *, tm_max=512, compute_dtype=None):
    """x: (B, C, H, W) NCHW.  weight: (E, C, P, P) (PyTorch Conv2d layout).
    bias: (E,).  Returns (B, num_patches, E) in x.dtype."""
    B, C, H, W = x.shape
    E = weight.shape[0]
    P = patch_size
    assert H % P == 0 and W % P == 0, "H/W must be divisible by patch_size"
    Hp, Wp = H // P, W // P
    N = Hp * Wp
    K = C * P * P
    M = B * N

    out_dtype = x.dtype
    cdtype = jnp.dtype(compute_dtype) if compute_dtype is not None else jnp.dtype(x.dtype)

    # Patchify: (B,C,Hp,P,Wp,P) -> (B,Hp,Wp,C,P,P) -> (M, K).  Flattening over
    # (C, P, P) matches the Conv2d weight layout.
    patches = x.reshape(B, C, Hp, P, Wp, P).transpose(0, 2, 4, 1, 3, 5).reshape(M, K)
    patches = patches.astype(cdtype)
    w2 = weight.reshape(E, K).T.astype(cdtype)        # (K, E)
    b2 = bias.astype(jnp.float32).reshape(1, E)       # resident f32 bias

    in_item = cdtype.itemsize
    w_item = in_item
    out_item = jnp.dtype(out_dtype).itemsize

    # dtype-aware sublane multiple.
    sub = max(8, 32 // in_item)

    # VMEM footprint for a given row tile (lane-padded shapes, conservatively
    # counting every operand double-buffered).
    K_lane = _round_up(K, 128)
    E_lane = _round_up(E, 128)
    Kw_rows = _round_up(K, sub)

    def vmem_bytes(tm):
        return (2 * tm * K_lane * in_item            # pipelined x tiles
                + 2 * Kw_rows * E_lane * w_item      # resident weight
                + 2 * 8 * E_lane * 4                 # resident f32 bias
                + 2 * tm * E_lane * out_item)        # pipelined out tiles

    try:
        vmem_cap = int(pltpu.get_tpu_info().vmem_capacity_bytes)
    except Exception:
        vmem_cap = 64 * 2**20                        # conservative: v7x per-TC VMEM
    vmem_cap_budget = int(0.625 * vmem_cap)          # ~40 MiB on v7x, ~80 MiB on v5e/v6e

    # >= 2 grid steps so v7x megacore sharding and pipelining are useful.
    TM = max(sub, min(tm_max, _round_up(-(-M // 2), sub)))
    while TM > sub and 2 * vmem_bytes(TM) > vmem_cap_budget:
        TM = max(sub, ((TM // 2) // sub) * sub)
    M_pad = _round_up(M, TM)

    if M_pad != M:
        patches = jnp.pad(patches, ((0, M_pad - M), (0, 0)))

    vmem_limit = int(min(max(2 * vmem_bytes(TM), 16 * 2**20), vmem_cap_budget))

    cost = pl.CostEstimate(
        flops=2 * M * K * E,
        bytes_accessed=(M * K * in_item + K * E * w_item + E * 4 + M * E * out_item),
        transcendentals=0,
    )

    out = pl.pallas_call(
        _patch_proj_kernel,
        out_shape=jax.ShapeDtypeStruct((M_pad, E), out_dtype),
        grid=(M_pad // TM,),
        in_specs=[
            pl.BlockSpec((TM, K), lambda i: (i, 0)),   # row tile, K == full dim
            pl.BlockSpec((K, E), lambda i: (0, 0)),    # resident weight
            pl.BlockSpec((1, E), lambda i: (0, 0)),    # resident f32 bias
        ],
        out_specs=pl.BlockSpec((TM, E), lambda i: (i, 0)),
        compiler_params=pltpu.CompilerParams(
            dimension_semantics=("parallel",),
            vmem_limit_bytes=vmem_limit,
        ),
        cost_estimate=cost,
    )(patches, w2, b2)

    if M_pad != M:
        out = out[:M]
    return out.reshape(B, N, E)


if __name__ == "__main__":
    # Module defaults: img_size=28, patch_size=7, in_ch=1, embed_dim=64.
    B, C, H, W = 2, 1, 28, 28
    P, E = 7, 64

    key = jax.random.PRNGKey(0)
    kx, kw, kb = jax.random.split(key, 3)

    x = jax.random.normal(kx, (B, C, H, W), dtype=jnp.float32)
    fan_in = C * P * P
    bound = 1.0 / (fan_in ** 0.5)
    weight = jax.random.uniform(kw, (E, C, P, P), jnp.float32, -bound, bound)
    bias = jax.random.uniform(kb, (E,), jnp.float32, -bound, bound)

    out = jax.block_until_ready(patch_embed(x, weight, bias, P))

    # Reference: plain-JAX equivalent of the PyTorch conv path.
    ref = jax.lax.conv_general_dilated(
        x, weight, window_strides=(P, P), padding="VALID",
        dimension_numbers=("NCHW", "OIHW", "NCHW"))
    ref = ref + bias.reshape(1, E, 1, 1)
    ref = ref.reshape(B, E, -1).transpose(0, 2, 1)     # (B, N, E)

    assert out.shape == (B, (H // P) * (W // P), E), out.shape
    assert jnp.allclose(out, ref, atol=1e-4, rtol=1e-4)

    # bf16-MXU path (halves activation/weight HBM bytes, rated MXU throughput);
    # f32 accumulation, so only a loose tolerance is needed.
    out_bf16 = jax.block_until_ready(
        patch_embed(x, weight, bias, P, compute_dtype=jnp.bfloat16))
    assert out_bf16.shape == out.shape
    assert jnp.allclose(out_bf16, ref, atol=5e-2, rtol=5e-2)

    print("KERNEL_OK")
</pallas_src>

<mosaic_0001>
module attributes {stable_mosaic.version = 11 : i64} {
  func.func @_patch_proj_kernel(%arg0: i32, %arg1: memref<16x49xf32, #tpu.memory_space<vmem>>, %arg2: memref<49x64xf32, #tpu.memory_space<vmem>>, %arg3: memref<1x64xf32, #tpu.memory_space<vmem>>, %arg4: memref<16x64xf32, #tpu.memory_space<vmem>>) attributes {dimension_semantics = [#tpu.dimension_semantics<parallel>], iteration_bounds = array<i64: 2>, scalar_prefetch = 0 : i64, scratch_operands = 0 : i64, tpu.core_type = #tpu.core_type<tc>, window_params = [{transform_indices = @transform_0, window_bounds = array<i64: 16, 49>}, {pipeline_mode = #tpu.pipeline_mode<synchronous>, transform_indices = @transform_1, window_bounds = array<i64: 49, 64>}, {pipeline_mode = #tpu.pipeline_mode<synchronous>, transform_indices = @transform_2, window_bounds = array<i64: 1, 64>}, {transform_indices = @transform_3, window_bounds = array<i64: 16, 64>}]} {
    %c0 = arith.constant 0 : index
    %c0_0 = arith.constant 0 : index
    %0 = vector.load %arg1[%c0, %c0_0] : memref<16x49xf32, #tpu.memory_space<vmem>>, vector<16x49xf32>
    %c0_1 = arith.constant 0 : index
    %c0_2 = arith.constant 0 : index
    %1 = vector.load %arg2[%c0_1, %c0_2] : memref<49x64xf32, #tpu.memory_space<vmem>>, vector<49x64xf32>
    %cst = arith.constant dense<0.000000e+00> : vector<16x64xf32>
    %2 = tpu.matmul %0, %1, %cst {dimension_numbers = #tpu.dot_dimension_numbers<[1], [0], [0], [1], [0, 0, 1, 1], [], []>} : vector<16x49xf32>, vector<49x64xf32>, vector<16x64xf32> -> vector<16x64xf32>
    %c0_3 = arith.constant 0 : index
    %c0_4 = arith.constant 0 : index
    %3 = vector.load %arg3[%c0_3, %c0_4] : memref<1x64xf32, #tpu.memory_space<vmem>>, vector<1x64xf32>
    %4 = vector.broadcast %3 : vector<1x64xf32> to vector<16x64xf32>
    %5 = arith.addf %2, %4 : vector<16x64xf32>
    %c0_5 = arith.constant 0 : index
    %c0_6 = arith.constant 0 : index
    %6 = vector.load %arg4[%c0_5, %c0_6] : memref<16x64xf32, #tpu.memory_space<vmem>>, vector<16x64xf32>
    tpu.vector_store %arg4[%c0_5, %c0_6], %5 {strides = array<i32>} : memref<16x64xf32, #tpu.memory_space<vmem>>, vector<16x64xf32>,
    return
  }
  func.func @transform_0(%arg0: i32) -> (i32, i32) {
    %c0_i32 = arith.constant 0 : i32
    %c0_i32_0 = arith.constant 0 : i32
    return %arg0, %c0_i32 : i32, i32
  }
  func.func @transform_1(%arg0: i32) -> (i32, i32) {
    %c0_i32 = arith.constant 0 : i32
    %c0_i32_0 = arith.constant 0 : i32
    %c0_i32_1 = arith.constant 0 : i32
    return %c0_i32, %c0_i32_0 : i32, i32
  }
  func.func @transform_2(%arg0: i32) -> (i32, i32) {
    %c0_i32 = arith.constant 0 : i32
    %c0_i32_0 = arith.constant 0 : i32
    %c0_i32_1 = arith.constant 0 : i32
    return %c0_i32, %c0_i32_0 : i32, i32
  }
  func.func @transform_3(%arg0: i32) -> (i32, i32) {
    %c0_i32 = arith.constant 0 : i32
    %c0_i32_0 = arith.constant 0 : i32
    return %arg0, %c0_i32 : i32, i32
  }
}

</mosaic_0001>

<llo_original>
// kernel: tpu_custom_call.1
$region0: #{tpu_custom_call.1}
  #allocation0 [shape = 'u32[]', space=smem, size = 0x4, offset = 0x4, fixed_abs, tag = 'smem constant byte address 0x4 - core index']
  #allocation1 [shape = 'u32[144,128]{1,0:T(1,128)}', space=vmem, size = 0x12000, scoped, tag = 'internal scratch']
  %s0 = inlined_call_operand.hbm [shape: f32[32,49], index: 0, kind: input, shape index: {}]
  %s1 = inlined_call_operand.hbm [shape: f32[49,64], index: 1, kind: input, shape index: {}]
  %s2 = inlined_call_operand.vmem [shape: f32[1,64], index: 2, kind: input, shape index: {}]
  %s3 = inlined_call_operand.hbm [shape: f32[32,64], index: 3, kind: output, shape index: {}]
  %s4 = sld [smem:[#allocation0]]
  $region53: #{tpu_custom_call.1} parent=0
    _
  %s6 = ssub.s32 1, %s4
  %s7 = scalar_select 0, %s6, %s4
  $region1: #{tpu_custom_call.1} parent=0
    #allocation2 [shape = 'u8[16384]{0}', space=vmem, size = 0x4000, scoped, tag = 'input window, operand 0']
    #allocation3 [shape = 's32[2]{0}', space=sflag, size = 0x8, scoped, tag = 'scoped memory for tpu_custom_call.1']
    #allocation4 [shape = 's32[2]{0}', space=sflag, size = 0x8, scoped, tag = 'scoped memory for tpu_custom_call.1']
    #allocation5 [shape = 'u8[28672]{0}', space=vmem, size = 0x7000, scoped, tag = 'input window, operand 1, single buffered']
    #allocation6 [shape = 's32[1]{0}', space=sflag, size = 0x4, scoped, tag = 'scoped memory for tpu_custom_call.1']
    #allocation7 [shape = 'u8[16384]{0}', space=vmem, size = 0x4000, scoped, tag = 'output window, operand 0']
    %8 = vsyncpa [#allocation3], 0
    %s9 = scalar_lea.sflag [#allocation3], 1
    %10 = vsyncpa %s9, 0
    %11 = vsyncpa [#allocation6], 0
    %12 = vsyncpa [#allocation4], 0
    %s13 = scalar_lea.sflag [#allocation4], 1
    %14 = vsyncpa %s13, 0
    loop: start=0, step=1, limit=4
    $region2: #{tpu_custom_call.1} parent=1 // loop_pre_header
      _
    $region3: #{tpu_custom_call.1} parent=1 // loop_header
      %s16 = sphi 0, %s20
      %p17 = scmp.ge.s32.totalorder %s16, 4
      %s26 = sphi 0, %s28
      %s29 = sphi 0, %s26
      %s30 = sphi 0, %s29
      %s46 = sphi 0, %s30
      %s50 = sphi 0, %s50
      %s52 = sphi 0, %s50
      %s53 = sphi 0, %s52
      %s67 = sphi 0, %s53
      %s71 = sphi 0, %s71
      %s73 = sphi 0, %s71
      %s74 = sphi 0, %s73
      %s88 = sphi 0, %s74
      %s94 = sphi 0, %s96
      %s97 = sphi 0, %s94
      %s98 = sphi 0, %s97
      %s114 = sphi 0, %s98
    $region4: #{tpu_custom_call.1} parent=1 // loop_header_branch
      %19 = sbr.rel (%p17) target = $region8
    $region5: #{tpu_custom_call.1} parent=1 // loop_body
      %s21 = ssub.s32 %s16, 1
      %s22 = ssub.s32 %s16, 2
      %s23 = sadd.s32 %s16, 1
      %s24 = ssub.s32 %s16, %s23
      %p25 = scmp.eq.s32.totalorder %s24, 0
      %s27 = sadd.s32 %s26, 1
      %s28 = scalar_select %p25, %s26, %s27
      %p31 = pneg %p25
      %p32 = scmp.eq.s32.totalorder %s16, 1
      %p33 = por %p31, %p32
      %p34 = scmp.ne.s32.totalorder %s26, %s29
      %p35 = scmp.eq.s32.totalorder %s16, 0
      %p36 = por %p34, %p35
      %p37 = scmp.ne.s32.totalorder %s26, %s29
      %p38 = scmp.eq.s32.totalorder %s21, 1
      %p39 = por %p37, %p38
      %p40 = scmp.ne.s32.totalorder %s29, %s30
      %p41 = scmp.eq.s32.totalorder %s21, 0
      %p42 = por %p40, %p41
      %p43 = scmp.ne.s32.totalorder %s29, %s30
      %p44 = scmp.eq.s32.totalorder %s22, 1
      %p45 = por %p43, %p44
      %p47 = scmp.ne.s32.totalorder %s30, %s46
      %p48 = scmp.eq.s32.totalorder %s22, 0
      %p49 = por %p47, %p48
      %s51 = sadd.s32 %s50, 1
      %p54 = scmp.eq.s32.totalorder %s16, 1
      %p55 = scmp.ne.s32.totalorder %s50, %s52
      %p56 = scmp.eq.s32.totalorder %s16, 0
      %p57 = por %p55, %p56
      %p58 = scmp.ne.s32.totalorder %s50, %s52
      %p59 = scmp.eq.s32.totalorder %s21, 1
      %p60 = por %p58, %p59
      %p61 = scmp.ne.s32.totalorder %s52, %s53
      %p62 = scmp.eq.s32.totalorder %s21, 0
      %p63 = por %p61, %p62
      %p64 = scmp.ne.s32.totalorder %s52, %s53
      %p65 = scmp.eq.s32.totalorder %s22, 1
      %p66 = por %p64, %p65
      %p68 = scmp.ne.s32.totalorder %s53, %s67
      %p69 = scmp.eq.s32.totalorder %s22, 0
      %p70 = por %p68, %p69
      %s72 = sadd.s32 %s71, 1
      %p75 = scmp.eq.s32.totalorder %s16, 1
      %p76 = scmp.ne.s32.totalorder %s71, %s73
      %p77 = scmp.eq.s32.totalorder %s16, 0
      %p78 = por %p76, %p77
      %p79 = scmp.ne.s32.totalorder %s71, %s73
      %p80 = scmp.eq.s32.totalorder %s21, 1
      %p81 = por %p79, %p80
      %p82 = scmp.ne.s32.totalorder %s73, %s74
      %p83 = scmp.eq.s32.totalorder %s21, 0
      %p84 = por %p82, %p83
      %p85 = scmp.ne.s32.totalorder %s73, %s74
      %p86 = scmp.eq.s32.totalorder %s22, 1
      %p87 = por %p85, %p86
      %p89 = scmp.ne.s32.totalorder %s74, %s88
      %p90 = scmp.eq.s32.totalorder %s22, 0
      %p91 = por %p89, %p90
      %s92 = ssub.s32 %s16, %s23
      %p93 = scmp.eq.s32.totalorder %s92, 0
      %s95 = sadd.s32 %s94, 1
      %s96 = scalar_select %p93, %s94, %s95
      %p99 = pneg %p93
      %p100 = scmp.eq.s32.totalorder %s16, 1
      %p101 = por %p99, %p100
      %p102 = scmp.ne.s32.totalorder %s94, %s97
      %p103 = scmp.eq.s32.totalorder %s16, 0
      %p104 = por %p102, %p103
      %p105 = scmp.ne.s32.totalorder %s94, %s97
      %p106 = scmp.eq.s32.totalorder %s21, 1
      %p107 = por %p105, %p106
      %p108 = scmp.ne.s32.totalorder %s97, %s98
      %p109 = scmp.eq.s32.totalorder %s21, 0
      %p110 = por %p108, %p109
      %p111 = scmp.ne.s32.totalorder %s97, %s98
      %p112 = scmp.eq.s32.totalorder %s22, 1
      %p113 = por %p111, %p112
      %p115 = scmp.ne.s32.totalorder %s98, %s114
      %p116 = scmp.eq.s32.totalorder %s22, 0
      %p117 = por %p115, %p116
      %p118 = scmp.le.s32.totalorder 1, %s16
      %p119 = scmp.lt.s32.totalorder %s16, 3
      %p120 = pnand %p118, %p119
      %p121 = pneg %p120
      // Predicated region
      $region9: #{tpu_custom_call.1} parent=5 // pred_check
        _
      $region10: #{tpu_custom_call.1} parent=5 // pred_check_branch
        %123 = sbr.rel (%p120) target = $region12
      $region11: #{tpu_custom_call.1} parent=5 // pred_region
        %s124 = ssub.s32 %s16, 1
        // Predicated region
        $region13: #{tpu_custom_call.1} parent=11 // pred_check
          %p125 = pneg %p63
        $region14: #{tpu_custom_call.1} parent=11 // pred_check_branch
          %127 = sbr.rel (%p125) target = $region16
        $region15: #{tpu_custom_call.1} parent=11 // pred_region
          %s129 = ssub.s32 896, 896
          %130 = vsyncadd [#allocation6], %s129
          %s131 = sshll.u32 [#allocation5], 4
          %s132 = int_to_ptr.vmem [resolvable:$true] %s131
          %137 = dma.hbm_to_vmem [thread:$0]  %s1, 896, %s132, [#allocation6], 128, 128, 8
        $region16: #{tpu_custom_call.1} parent=11 // pred_fallthru
          _
        // Predicated region
        $region17: #{tpu_custom_call.1} parent=11 // pred_check
          %p138 = pneg %p84
        $region18: #{tpu_custom_call.1} parent=11 // pred_check_branch
          %140 = sbr.rel (%p138) target = $region20
        $region19: #{tpu_custom_call.1} parent=11 // pred_region
          _
        $region20: #{tpu_custom_call.1} parent=11 // pred_fallthru
          _
      $region12: #{tpu_custom_call.1} parent=5 // pred_fallthru
        _
      %p141 = scmp.lt.s32.totalorder %s16, 2
      // Predicated region
      $region21: #{tpu_custom_call.1} parent=5 // pred_check
        %p142 = pneg %p141
      $region22: #{tpu_custom_call.1} parent=5 // pred_check_branch
        %144 = sbr.rel (%p142) target = $region24
      $region23: #{tpu_custom_call.1} parent=5 // pred_region
        // Predicated region
        $region25: #{tpu_custom_call.1} parent=23 // pred_check
          %p145 = pneg %p36
        $region26: #{tpu_custom_call.1} parent=23 // pred_check_branch
          %147 = sbr.rel (%p145) target = $region28
        $region27: #{tpu_custom_call.1} parent=23 // pred_region
          %s148 = sand.u32 %s26, 1
          %s149 = scalar_lea.sflag [#allocation3], %s148
          %s150 = sand.u32 %s26, 1
          %s151 = smul.addr %s150, 16
          %s152 = scalar_lea.vmem [#allocation2], %s151
          %s153 = smul.u32 2, %s16
          %s155 = ssub.s32 256, 256
          %156 = vsyncadd %s149, %s155
          %s157 = smul.addr %s153, 128
          %s158 = scalar_lea.hbm %s0, %s157
          %s159 = sshll.u32 %s152, 4
          %s160 = int_to_ptr.vmem [resolvable:$true] %s159
          %165 = dma.hbm_to_vmem [thread:$0]  %s158, 256, %s160, %s149, 128, 128, 8
        $region28: #{tpu_custom_call.1} parent=23 // pred_fallthru
          _
      $region24: #{tpu_custom_call.1} parent=5 // pred_fallthru
        _
      %p166 = scmp.le.s32.totalorder 1, %s16
      %p167 = scmp.lt.s32.totalorder %s16, 3
      %p168 = pnand %p166, %p167
      %p169 = pneg %p168
      // Predicated region
      $region29: #{tpu_custom_call.1} parent=5 // pred_check
        _
      $region30: #{tpu_custom_call.1} parent=5 // pred_check_branch
        %171 = sbr.rel (%p168) target = $region32
      $region31: #{tpu_custom_call.1} parent=5 // pred_region
        %s172 = ssub.s32 %s16, 1
        %s173 = sand.u32 %s29, 1
        %s174 = scalar_lea.sflag [#allocation3], %s173
        %s175 = sand.u32 %s29, 1
        %s176 = smul.addr %s175, 16
        %s177 = scalar_lea.vmem [#allocation2], %s176
        // Predicated region
        $region33: #{tpu_custom_call.1} parent=31 // pred_check
          %p178 = pneg %p42
        $region34: #{tpu_custom_call.1} parent=31 // pred_check_branch
          %180 = sbr.rel (%p178) target = $region36
        $region35: #{tpu_custom_call.1} parent=31 // pred_region
          %181 = dma.done %s174, 256
        $region36: #{tpu_custom_call.1} parent=31 // pred_fallthru
          _
        // Predicated region
        $region37: #{tpu_custom_call.1} parent=31 // pred_check
          %p182 = pneg %p63
        $region38: #{tpu_custom_call.1} parent=31 // pred_check_branch
          %184 = sbr.rel (%p182) target = $region40
        $region39: #{tpu_custom_call.1} parent=31 // pred_region
          %185 = dma.done [#allocation6], 896
        $region40: #{tpu_custom_call.1} parent=31 // pred_fallthru
          _
        %s186 = sand.u32 %s29, 1
        %s187 = scalar_lea.sflag [#allocation3], %s186
        %s188 = sand.u32 %s29, 1
        %s189 = smul.addr %s188, 16
        %s190 = scalar_lea.vmem [#allocation2], %s189
        %p191 = pneg %p42
        %p192 = pneg %p39
        %p193 = pneg %p63
        %p194 = pneg %p60
        %p195 = pneg %p84
        %p196 = pneg %p81
        %p197 = pneg %p110
        %p198 = pneg %p107
        %s199 = sand.u32 %s97, 1
        %s200 = scalar_lea.sflag [#allocation4], %s199
        %s201 = sand.u32 %s97, 1
        %s202 = smul.addr %s201, 16
        %s203 = scalar_lea.vmem [#allocation7], %s202
        %s204 = smul.u32 2, %s21
        %s205 = smul.u32 2, %s21
        %v206 = vld [vmem:[%s177] sm:$0xff]
        %v207 = vld [vmem:[%s177 + $0x8] sm:$0xff]
        %v208 = vld [vmem:[#allocation5] sm:$0xff]
        %v209 = vld [vmem:[#allocation5 + $0x8] sm:$0xff]
        %v210 = vld [vmem:[#allocation5 + $0x10] sm:$0xff]
        %v211 = vld [vmem:[#allocation5 + $0x18] sm:$0xff]
        %v212 = vld [vmem:[#allocation5 + $0x20] sm:$0xff]
        %v213 = vld [vmem:[#allocation5 + $0x28] sm:$0xff]
        %v214 = vld [vmem:[#allocation5 + $0x30] sm:$0x1]
        %v215 = vld [vmem:[%s2] sm:$0x1]
        %v217 = vlaneseq
        %v218 = vshrl.u32 %v217, 7
        %v219 = vsub.s32 0, %v218
        %v220 = vrot.slane %v215, %v219
        %vm222 = vcmask 400384
        %v224 = vsel %vm222, %v206, 0
        %v227 = vsel %vm222, %v207, 0
        %vm229 = vcmask 1040384
        %v231 = vsel %vm229, %v214, 0
        %233 = vmatprep.subr.mxu0 0.0
        %234 = vmatpush1.msra.mxu0 %v208
        %235 = vmatprep.subr.mxu0 0.0
        %236 = vmatpush1.msra.mxu0 %v209
        %237 = vmatprep.subr.mxu0 0.0
        %238 = vmatpush1.msra.mxu0 %v210
        %239 = vmatprep.subr.mxu0 0.0
        %240 = vmatpush1.msra.mxu0 %v211
        %241 = vmatprep.subr.mxu0 0.0
        %242 = vmatpush1.msra.mxu0 %v212
        %243 = vmatprep.subr.mxu0 0.0
        %244 = vmatpush1.msra.mxu0 %v213
        %245 = vmatprep.subr.mxu0 0.0
        %246 = vmatpush1.msra.mxu0 %v231
        %247 = vmatprep.subr.mxu0 0.0
        %248 = vmatpush1.msra.mxu0 0.0
        %249 = vmatprep.subr.mxu0 0.0
        %250 = vmatpush1.msra.mxu0 0.0
        %251 = vmatprep.subr.mxu0 0.0
        %252 = vmatpush1.msra.mxu0 0.0
        %253 = vmatprep.subr.mxu0 0.0
        %254 = vmatpush1.msra.mxu0 0.0
        %255 = vmatprep.subr.mxu0 0.0
        %256 = vmatpush1.msra.mxu0 0.0
        %257 = vmatprep.subr.mxu0 0.0
        %258 = vmatpush1.msra.mxu0 0.0
        %259 = vmatprep.subr.mxu0 0.0
        %260 = vmatpush1.msra.mxu0 0.0
        %261 = vmatprep.subr.mxu0 0.0
        %262 = vmatpush1.msra.mxu0 0.0
        %263 = vmatprep.subr.mxu0 0.0
        %264 = vmatpush1.msra.mxu0 0.0
        %265 = vmatprep.subr.mxu0 0.0
        %266 = vmatpush1.msra.mxu0 0.0
        %267 = vmatprep.subr.mxu0 0.0
        %268 = vmatpush1.msra.mxu0 0.0
        %269 = vmatprep.subr.mxu0 0.0
        %270 = vmatpush1.msra.mxu0 0.0
        %271 = vmatprep.subr.mxu0 0.0
        %272 = vmatpush1.msra.mxu0 0.0
        %273 = vmatprep.subr.mxu0 0.0
        %274 = vmatpush1.msra.mxu0 0.0
        %275 = vmatprep.subr.mxu0 0.0
        %276 = vmatpush1.msra.mxu0 0.0
        %277 = vmatprep.subr.mxu0 0.0
        %278 = vmatpush1.msra.mxu0 0.0
        %279 = vmatprep.subr.mxu0 0.0
        %280 = vmatpush1.msra.mxu0 0.0
        %281 = vmatprep.subr.mxu0 0.0
        %282 = vmatpush1.msra.mxu0 0.0
        %283 = vmatprep.subr.mxu0 0.0
        %284 = vmatpush1.msra.mxu0 0.0
        %285 = vmatprep.subr.mxu0 0.0
        %286 = vmatpush1.msra.mxu0 0.0
        %287 = vmatprep.subr.mxu0 0.0
        %288 = vmatpush1.msra.mxu0 0.0
        %289 = vmatprep.subr.mxu0 0.0
        %290 = vmatpush1.msra.mxu0 0.0
        %291 = vmatprep.subr.mxu0 0.0
        %292 = vmatpush1.msra.mxu0 0.0
        %293 = vmatprep.subr.mxu0 0.0
        %294 = vmatpush1.msra.mxu0 0.0
        %295 = vmatprep.subr.mxu0 0.0
        %296 = vmatpush1.msra.mxu0 0.0
        %297 = vmatprep.mubr.f32.mxu0 0.0
        %298 = vmatmul.mubr.f32.gmra.mrb[0].mxu0 %v224
        %v299 = vpop.f32.mrb[0].mxu0
        %v300 = vadd.f32 %v220, %v299
        %v301 = vpop.f32.mrb[0].mxu0
        %302 = vmatprep.mubr.f32.mxu0 0.0
        %303 = vmatmul.mubr.f32.gmra.mrb[0].mxu0 %v227
        %v304 = vpop.f32.mrb[0].mxu0
        %v305 = vadd.f32 %v220, %v304
        %v306 = vpop.f32.mrb[0].mxu0
        %307 = vdwg.mxu0
        %vm308 = vcmask 523264
        %309 = vst.msk [vmem:[%s203] sm:$0xff] %vm308, %v300
        %310 = vst.msk [vmem:[%s203 + $0x8] sm:$0xff] %vm308, %v305
        %s311 = sand.u32 %s97, 1
        %s312 = scalar_lea.sflag [#allocation4], %s311
        %s313 = sand.u32 %s97, 1
        %s314 = smul.addr %s313, 16
        %s315 = scalar_lea.vmem [#allocation7], %s314
        // Predicated region
        $region41: #{tpu_custom_call.1} parent=31 // pred_check
          %p316 = pneg %p107
        $region42: #{tpu_custom_call.1} parent=31 // pred_check_branch
          %318 = sbr.rel (%p316) target = $region44
        $region43: #{tpu_custom_call.1} parent=31 // pred_region
          %s319 = smul.u32 2, %s21
          %s321 = ssub.s32 256, 256
          %322 = vsyncadd %s312, %s321
          %s323 = smul.addr %s319, 128
          %s324 = scalar_lea.hbm %s3, %s323
          %s325 = sshll.u32 %s315, 4
          %s326 = int_to_ptr.vmem [resolvable:$true] %s325
          %331 = dma.vmem_to_hbm [thread:$0]  %s326, 256, %s324, %s312, 128, 128, 8
        $region44: #{tpu_custom_call.1} parent=31 // pred_fallthru
          _
      $region32: #{tpu_custom_call.1} parent=5 // pred_fallthru
        _
      %p332 = scmp.le.s32.totalorder 2, %s16
      // Predicated region
      $region45: #{tpu_custom_call.1} parent=5 // pred_check
        %p333 = pneg %p332
      $region46: #{tpu_custom_call.1} parent=5 // pred_check_branch
        %335 = sbr.rel (%p333) target = $region48
      $region47: #{tpu_custom_call.1} parent=5 // pred_region
        %s336 = ssub.s32 %s16, 2
        // Predicated region
        $region49: #{tpu_custom_call.1} parent=47 // pred_check
          %p337 = pneg %p113
        $region50: #{tpu_custom_call.1} parent=47 // pred_check_branch
          %339 = sbr.rel (%p337) target = $region52
        $region51: #{tpu_custom_call.1} parent=47 // pred_region
          %s340 = sand.u32 %s98, 1
          %s341 = scalar_lea.sflag [#allocation4], %s340
          %s342 = sand.u32 %s98, 1
          %s343 = smul.addr %s342, 16
          %s344 = scalar_lea.vmem [#allocation7], %s343
          %345 = dma.done %s341, 256
        $region52: #{tpu_custom_call.1} parent=47 // pred_fallthru
          _
      $region48: #{tpu_custom_call.1} parent=5 // pred_fallthru
        _
    $region6: #{tpu_custom_call.1} parent=1 // loop_footer
      %s20 = sadd.s32 1, %s16
    $region7: #{tpu_custom_call.1} parent=1 // loop_footer_branch
      %15 = sbr.rel target = $region3
    $region8: #{tpu_custom_call.1} parent=1 // loop_exit
      _
    %346 = vsyncpa [#allocation3], 1
    %s347 = scalar_lea.sflag [#allocation3], 1
    %348 = vsyncpa %s347, 1
    %349 = vsyncpa [#allocation6], 1
    %350 = vsyncpa [#allocation4], 1
    %s351 = scalar_lea.sflag [#allocation4], 1
    %352 = vsyncpa %s351, 1

</llo_original>
